<compile_context>
chip_gen: v7x
topology: tpu7x:2x2x1
jax: 0.10.0
libtpu: 0.0.40
codegen_flags: <defaults>
</compile_context>

<pallas_src>
import jax
import jax.numpy as jnp
from jax import lax
from jax.experimental import pallas as pl
from jax.experimental.pallas import tpu as pltpu


def _mlp_kernel(x_ref,
                w1_ref, b1_ref,
                w2_ref, b2_ref,
                w3_ref, b3_ref,
                w4t_ref, b4_ref,
                o_ref):
    # Cast the streamed f32 x block to bf16 in-kernel (MXU input).
    x = x_ref[...].astype(jnp.bfloat16)

    # layer1 (BN1 folded) -> ReLU          (dropout = identity in eval)
    h = jnp.dot(x, w1_ref[...], preferred_element_type=jnp.float32)
    h = jnp.maximum(h + b1_ref[...], 0.0)
    # layer2 (BN2 folded) -> ReLU
    h = jnp.dot(h.astype(jnp.bfloat16), w2_ref[...],
                preferred_element_type=jnp.float32)
    h = jnp.maximum(h + b2_ref[...], 0.0)
    # layer3 (BN3 folded) -> ReLU
    h = jnp.dot(h.astype(jnp.bfloat16), w3_ref[...],
                preferred_element_type=jnp.float32)
    h = jnp.maximum(h + b3_ref[...], 0.0)
    # layer4: transposed (1, tb) result so the store is lane-dense (batch on
    # lanes).  Contract the 32-dim of w4^T (1, 32) with the 32-dim of h.
    o = lax.dot_general(w4t_ref[...], h.astype(jnp.bfloat16),
                        (((1,), (1,)), ((), ())),
                        preferred_element_type=jnp.float32)
    # Final bias is a scalar living in SMEM.
    o_ref[...] = o + b4_ref[0, 0]


def _choose_tb(B):
    """Pick the batch tile.

    - >= 2 grid blocks whenever B allows it, so v7x's two TensorCores both get
      work via the "parallel" grid axis (on v5e/v6e 2 blocks vs 1 is ~free).
    - Each multi-block tile is a multiple of 128 so the (1, tb) output block
      stays an unmasked, lane-dense store.
    - Capped at 2048 rows/block; VMEM use is negligible on all generations.
    """
    if B <= 256:
        return max(8, -(-B // 8) * 8)          # single block, 8-row aligned
    half = -(-B // 2)
    tb = -(-half // 128) * 128                 # multiple of 128 lanes
    return min(tb, 2048)


def emissions_model_forward(x, params, *, tb=None):
    """x: (B, input_dim) float32; params: folded/bf16 params (see fold_params).

    Returns (B, 1) float32.
    """
    B, D = x.shape
    if tb is None:
        tb = _choose_tb(B)
    n_blocks = pl.cdiv(B, tb)
    B_pad = n_blocks * tb
    if B_pad != B:                               # only pad when tb does not divide B
        x = jnp.pad(x, ((0, B_pad - B), (0, 0)))
    # NOTE: x stays f32 here; the bf16 cast happens inside the kernel.

    w1, b1 = params["w1"], params["b1"]
    w2, b2 = params["w2"], params["b2"]
    w3, b3 = params["w3"], params["b3"]
    w4t, b4 = params["w4t"], params["b4"]

    in_specs = [
        pl.BlockSpec((tb, D), lambda i: (i, 0)),           # x: tiled over batch
        pl.BlockSpec(w1.shape, lambda i: (0, 0)),          # weights/biases:
        pl.BlockSpec(b1.shape, lambda i: (0, 0)),          #   resident, constant
        pl.BlockSpec(w2.shape, lambda i: (0, 0)),          #   index_map
        pl.BlockSpec(b2.shape, lambda i: (0, 0)),
        pl.BlockSpec(w3.shape, lambda i: (0, 0)),
        pl.BlockSpec(b3.shape, lambda i: (0, 0)),
        pl.BlockSpec(w4t.shape, lambda i: (0, 0)),
        pl.BlockSpec(memory_space=pltpu.MemorySpace.SMEM), # b4: scalar in SMEM
    ]
    out_specs = pl.BlockSpec((1, tb), lambda i: (0, i))    # lane-dense output

    # Advisory cost hint: this call is launch/overhead dominated, help XLA
    # schedule neighbors around it.
    n_flops = 2 * B_pad * (D * 128 + 128 * 64 + 64 * 32 + 32 * 1)
    n_bytes = (B_pad * D * 4                                    # x (f32)
               + (D * 128 + 128 * 64 + 64 * 32 + 32) * 2        # bf16 weights
               + (128 + 64 + 32 + 1) * 4                        # f32 biases
               + B_pad * 4)                                     # out (f32)
    cost = pl.CostEstimate(flops=n_flops, transcendentals=0,
                           bytes_accessed=n_bytes)

    out_t = pl.pallas_call(
        _mlp_kernel,
        out_shape=jax.ShapeDtypeStruct((1, B_pad), jnp.float32),
        grid=(n_blocks,),
        in_specs=in_specs,
        out_specs=out_specs,
        compiler_params=pltpu.CompilerParams(
            dimension_semantics=("parallel",)),
        cost_estimate=cost,
    )(x, w1, b1, w2, b2, w3, b3, w4t, b4)

    return out_t[0, :B].reshape(B, 1)


def make_raw_params(key, input_dim):
    """Deterministic synthetic params matching EmissionsModel.__init__."""
    dims = [input_dim, 128, 64, 32, 1]
    keys = jax.random.split(key, 16)
    raw = {}
    ki = 0
    for li, (d_in, d_out) in enumerate(zip(dims[:-1], dims[1:]), start=1):
        raw[f"w{li}"] = jax.random.normal(keys[ki], (d_in, d_out), jnp.float32) * 0.1; ki += 1
        raw[f"b{li}"] = jax.random.normal(keys[ki], (1, d_out), jnp.float32) * 0.1;    ki += 1
        if li <= 3:
            raw[f"gamma{li}"] = 1.0 + 0.1 * jax.random.normal(keys[ki], (1, d_out), jnp.float32); ki += 1
            raw[f"beta{li}"] = 0.1 * jax.random.normal(keys[ki], (1, d_out), jnp.float32);        ki += 1
            raw[f"mean{li}"] = 0.05 * jnp.arange(d_out, dtype=jnp.float32).reshape(1, d_out)
            raw[f"var{li}"] = 1.0 + 0.01 * jnp.arange(d_out, dtype=jnp.float32).reshape(1, d_out)
    return raw


def fold_params(raw, eps=1e-5):
    """Fold eval-mode BN into the Linear weights; cast weights to bf16."""
    p = {}
    for li in (1, 2, 3):
        s = raw[f"gamma{li}"] / jnp.sqrt(raw[f"var{li}"] + eps)   # (1, d_out)
        t = raw[f"beta{li}"] - raw[f"mean{li}"] * s
        p[f"w{li}"] = (raw[f"w{li}"] * s).astype(jnp.bfloat16)    # column-wise fold
        p[f"b{li}"] = raw[f"b{li}"] * s + t                       # f32
    p["w4t"] = raw["w4"].T.astype(jnp.bfloat16)                   # (1, 32)
    p["b4"] = raw["b4"]                                           # (1, 1) f32
    return p


def reference_forward(x, p):
    """Pure-JAX reference using the same folded bf16/f32 numerics."""
    h = jnp.dot(x.astype(jnp.bfloat16), p["w1"],
                preferred_element_type=jnp.float32) + p["b1"]
    h = jnp.maximum(h, 0.0)
    h = jnp.dot(h.astype(jnp.bfloat16), p["w2"],
                preferred_element_type=jnp.float32) + p["b2"]
    h = jnp.maximum(h, 0.0)
    h = jnp.dot(h.astype(jnp.bfloat16), p["w3"],
                preferred_element_type=jnp.float32) + p["b3"]
    h = jnp.maximum(h, 0.0)
    o = jnp.dot(h.astype(jnp.bfloat16), p["w4t"].T,
                preferred_element_type=jnp.float32) + p["b4"]
    return o


if __name__ == "__main__":
    key = jax.random.PRNGKey(0)
    kx, kp = jax.random.split(key)

    batch, input_dim = 512, 32
    x = jax.random.normal(kx, (batch, input_dim), jnp.float32)

    raw = make_raw_params(kp, input_dim)
    params = fold_params(raw)

    out = emissions_model_forward(x, params)     # auto tile: tb=256, grid=2
    out = jax.block_until_ready(out)

    ref = reference_forward(x, params)
    assert out.shape == (batch, 1), out.shape
    assert jnp.allclose(out, ref, atol=2e-3, rtol=2e-3), "mismatch vs reference"

    print("KERNEL_OK")
</pallas_src>

<mosaic_0001>
module attributes {stable_mosaic.version = 11 : i64} {
  func.func @_mlp_kernel(%arg0: i32, %arg1: memref<256x32xf32, #tpu.memory_space<vmem>>, %arg2: memref<32x128xbf16, #tpu.memory_space<vmem>>, %arg3: memref<1x128xf32, #tpu.memory_space<vmem>>, %arg4: memref<128x64xbf16, #tpu.memory_space<vmem>>, %arg5: memref<1x64xf32, #tpu.memory_space<vmem>>, %arg6: memref<64x32xbf16, #tpu.memory_space<vmem>>, %arg7: memref<1x32xf32, #tpu.memory_space<vmem>>, %arg8: memref<1x32xbf16, #tpu.memory_space<vmem>>, %arg9: memref<1x1xf32, #tpu.memory_space<smem>>, %arg10: memref<1x256xf32, #tpu.memory_space<vmem>>) attributes {dimension_semantics = [#tpu.dimension_semantics<parallel>], iteration_bounds = array<i64: 2>, scalar_prefetch = 0 : i64, scratch_operands = 0 : i64, tpu.core_type = #tpu.core_type<tc>, window_params = [{transform_indices = @transform_0, window_bounds = array<i64: 256, 32>}, {pipeline_mode = #tpu.pipeline_mode<synchronous>, transform_indices = @transform_1, window_bounds = array<i64: 32, 128>}, {pipeline_mode = #tpu.pipeline_mode<synchronous>, transform_indices = @transform_2, window_bounds = array<i64: 1, 128>}, {pipeline_mode = #tpu.pipeline_mode<synchronous>, transform_indices = @transform_3, window_bounds = array<i64: 128, 64>}, {pipeline_mode = #tpu.pipeline_mode<synchronous>, transform_indices = @transform_4, window_bounds = array<i64: 1, 64>}, {pipeline_mode = #tpu.pipeline_mode<synchronous>, transform_indices = @transform_5, window_bounds = array<i64: 64, 32>}, {pipeline_mode = #tpu.pipeline_mode<synchronous>, transform_indices = @transform_6, window_bounds = array<i64: 1, 32>}, {pipeline_mode = #tpu.pipeline_mode<synchronous>, transform_indices = @transform_7, window_bounds = array<i64: 1, 32>}, {transform_indices = @transform_8, window_bounds = array<i64: 1, 1>}, {transform_indices = @transform_9, window_bounds = array<i64: 1, 256>}]} {
    %c0 = arith.constant 0 : index
    %c0_0 = arith.constant 0 : index
    %0 = vector.load %arg1[%c0, %c0_0] : memref<256x32xf32, #tpu.memory_space<vmem>>, vector<256x32xf32>
    %1 = arith.truncf %0 : vector<256x32xf32> to vector<256x32xbf16>
    %c0_1 = arith.constant 0 : index
    %c0_2 = arith.constant 0 : index
    %2 = vector.load %arg2[%c0_1, %c0_2] : memref<32x128xbf16, #tpu.memory_space<vmem>>, vector<32x128xbf16>
    %cst = arith.constant dense<0.000000e+00> : vector<256x128xf32>
    %3 = tpu.matmul %1, %2, %cst {dimension_numbers = #tpu.dot_dimension_numbers<[1], [0], [0], [1], [0, 0, 1, 1], [], []>} : vector<256x32xbf16>, vector<32x128xbf16>, vector<256x128xf32> -> vector<256x128xf32>
    %c0_3 = arith.constant 0 : index
    %c0_4 = arith.constant 0 : index
    %4 = vector.load %arg3[%c0_3, %c0_4] : memref<1x128xf32, #tpu.memory_space<vmem>>, vector<1x128xf32>
    %5 = vector.broadcast %4 : vector<1x128xf32> to vector<256x128xf32>
    %6 = arith.addf %3, %5 : vector<256x128xf32>
    %cst_5 = arith.constant 0.000000e+00 : f32
    %7 = vector.broadcast %cst_5 : f32 to vector<256x128xf32>
    %8 = arith.maximumf %6, %7 : vector<256x128xf32>
    %9 = arith.truncf %8 : vector<256x128xf32> to vector<256x128xbf16>
    %c0_6 = arith.constant 0 : index
    %c0_7 = arith.constant 0 : index
    %10 = vector.load %arg4[%c0_6, %c0_7] : memref<128x64xbf16, #tpu.memory_space<vmem>>, vector<128x64xbf16>
    %cst_8 = arith.constant dense<0.000000e+00> : vector<256x64xf32>
    %11 = tpu.matmul %9, %10, %cst_8 {dimension_numbers = #tpu.dot_dimension_numbers<[1], [0], [0], [1], [0, 0, 1, 1], [], []>} : vector<256x128xbf16>, vector<128x64xbf16>, vector<256x64xf32> -> vector<256x64xf32>
    %c0_9 = arith.constant 0 : index
    %c0_10 = arith.constant 0 : index
    %12 = vector.load %arg5[%c0_9, %c0_10] : memref<1x64xf32, #tpu.memory_space<vmem>>, vector<1x64xf32>
    %13 = vector.broadcast %12 : vector<1x64xf32> to vector<256x64xf32>
    %14 = arith.addf %11, %13 : vector<256x64xf32>
    %cst_11 = arith.constant 0.000000e+00 : f32
    %15 = vector.broadcast %cst_11 : f32 to vector<256x64xf32>
    %16 = arith.maximumf %14, %15 : vector<256x64xf32>
    %17 = arith.truncf %16 : vector<256x64xf32> to vector<256x64xbf16>
    %c0_12 = arith.constant 0 : index
    %c0_13 = arith.constant 0 : index
    %18 = vector.load %arg6[%c0_12, %c0_13] : memref<64x32xbf16, #tpu.memory_space<vmem>>, vector<64x32xbf16>
    %cst_14 = arith.constant dense<0.000000e+00> : vector<256x32xf32>
    %19 = tpu.matmul %17, %18, %cst_14 {dimension_numbers = #tpu.dot_dimension_numbers<[1], [0], [0], [1], [0, 0, 1, 1], [], []>} : vector<256x64xbf16>, vector<64x32xbf16>, vector<256x32xf32> -> vector<256x32xf32>
    %c0_15 = arith.constant 0 : index
    %c0_16 = arith.constant 0 : index
    %20 = vector.load %arg7[%c0_15, %c0_16] : memref<1x32xf32, #tpu.memory_space<vmem>>, vector<1x32xf32>
    %21 = vector.broadcast %20 : vector<1x32xf32> to vector<256x32xf32>
    %22 = arith.addf %19, %21 : vector<256x32xf32>
    %cst_17 = arith.constant 0.000000e+00 : f32
    %23 = vector.broadcast %cst_17 : f32 to vector<256x32xf32>
    %24 = arith.maximumf %22, %23 : vector<256x32xf32>
    %c0_18 = arith.constant 0 : index
    %c0_19 = arith.constant 0 : index
    %25 = vector.load %arg8[%c0_18, %c0_19] : memref<1x32xbf16, #tpu.memory_space<vmem>>, vector<1x32xbf16>
    %26 = arith.truncf %24 : vector<256x32xf32> to vector<256x32xbf16>
    %cst_20 = arith.constant dense<0.000000e+00> : vector<1x256xf32>
    %27 = tpu.matmul %25, %26, %cst_20 {dimension_numbers = #tpu.dot_dimension_numbers<[1], [1], [0], [0], [0, 0, 1, 0], [], []>} : vector<1x32xbf16>, vector<256x32xbf16>, vector<1x256xf32> -> vector<1x256xf32>
    %c0_21 = arith.constant 0 : index
    %c0_22 = arith.constant 0 : index
    %28 = memref.load %arg9[%c0_21, %c0_22] : memref<1x1xf32, #tpu.memory_space<smem>>
    %29 = vector.broadcast %28 : f32 to vector<1x256xf32>
    %30 = arith.addf %27, %29 : vector<1x256xf32>
    %c0_23 = arith.constant 0 : index
    %c0_24 = arith.constant 0 : index
    %31 = vector.load %arg10[%c0_23, %c0_24] : memref<1x256xf32, #tpu.memory_space<vmem>>, vector<1x256xf32>
    tpu.vector_store %arg10[%c0_23, %c0_24], %30 {strides = array<i32>} : memref<1x256xf32, #tpu.memory_space<vmem>>, vector<1x256xf32>,
    return
  }
  func.func @transform_0(%arg0: i32) -> (i32, i32) {
    %c0_i32 = arith.constant 0 : i32
    %c0_i32_0 = arith.constant 0 : i32
    return %arg0, %c0_i32 : i32, i32
  }
  func.func @transform_1(%arg0: i32) -> (i32, i32) {
    %c0_i32 = arith.constant 0 : i32
    %c0_i32_0 = arith.constant 0 : i32
    %c0_i32_1 = arith.constant 0 : i32
    return %c0_i32, %c0_i32_0 : i32, i32
  }
  func.func @transform_2(%arg0: i32) -> (i32, i32) {
    %c0_i32 = arith.constant 0 : i32
    %c0_i32_0 = arith.constant 0 : i32
    %c0_i32_1 = arith.constant 0 : i32
    return %c0_i32, %c0_i32_0 : i32, i32
  }
  func.func @transform_3(%arg0: i32) -> (i32, i32) {
    %c0_i32 = arith.constant 0 : i32
    %c0_i32_0 = arith.constant 0 : i32
    %c0_i32_1 = arith.constant 0 : i32
    return %c0_i32, %c0_i32_0 : i32, i32
  }
  func.func @transform_4(%arg0: i32) -> (i32, i32) {
    %c0_i32 = arith.constant 0 : i32
    %c0_i32_0 = arith.constant 0 : i32
    %c0_i32_1 = arith.constant 0 : i32
    return %c0_i32, %c0_i32_0 : i32, i32
  }
  func.func @transform_5(%arg0: i32) -> (i32, i32) {
    %c0_i32 = arith.constant 0 : i32
    %c0_i32_0 = arith.constant 0 : i32
    %c0_i32_1 = arith.constant 0 : i32
    return %c0_i32, %c0_i32_0 : i32, i32
  }
  func.func @transform_6(%arg0: i32) -> (i32, i32) {
    %c0_i32 = arith.constant 0 : i32
    %c0_i32_0 = arith.constant 0 : i32
    %c0_i32_1 = arith.constant 0 : i32
    return %c0_i32, %c0_i32_0 : i32, i32
  }
  func.func @transform_7(%arg0: i32) -> (i32, i32) {
    %c0_i32 = arith.constant 0 : i32
    %c0_i32_0 = arith.constant 0 : i32
    %c0_i32_1 = arith.constant 0 : i32
    return %c0_i32, %c0_i32_0 : i32, i32
  }
  func.func @transform_8(%arg0: i32) -> (i32, i32) {
    %c0_i32 = arith.constant 0 : i32
    %c0_i32_0 = arith.constant 0 : i32
    %c0_i32_1 = arith.constant 0 : i32
    return %c0_i32, %c0_i32_0 : i32, i32
  }
  func.func @transform_9(%arg0: i32) -> (i32, i32) {
    %c0_i32 = arith.constant 0 : i32
    %c0_i32_0 = arith.constant 0 : i32
    return %c0_i32, %arg0 : i32, i32
  }
}

</mosaic_0001>

<llo_original>
// kernel: tpu_custom_call.1
$region0: #{tpu_custom_call.1}
  #allocation0 [shape = 'u32[]', space=smem, size = 0x4, offset = 0x4, fixed_abs, tag = 'smem constant byte address 0x4 - core index']
  #allocation1 [shape = 'u32[144,128]{1,0:T(1,128)}', space=vmem, size = 0x12000, scoped, tag = 'internal scratch']
  #allocation2 [shape = 'f32[1,1]{1,0:T(1,128)S(6)}', space=smem, size = 0x200, scoped, tag = 'scoped memory for tpu_custom_call.1']
  %s0 = inlined_call_operand.vmem [shape: f32[512,32], index: 0, kind: input, shape index: {}]
  %s1 = inlined_call_operand.vmem [shape: bf16[32,128], index: 1, kind: input, shape index: {}]
  %s2 = inlined_call_operand.vmem [shape: f32[1,128], index: 2, kind: input, shape index: {}]
  %s3 = inlined_call_operand.vmem [shape: bf16[128,64], index: 3, kind: input, shape index: {}]
  %s4 = inlined_call_operand.vmem [shape: f32[1,64], index: 4, kind: input, shape index: {}]
  %s5 = inlined_call_operand.vmem [shape: bf16[64,32], index: 5, kind: input, shape index: {}]
  %s6 = inlined_call_operand.vmem [shape: f32[1,32], index: 6, kind: input, shape index: {}]
  %s7 = inlined_call_operand.vmem [shape: bf16[1,32], index: 7, kind: input, shape index: {}]
  %s8 = inlined_call_operand.<no memory space> [shape: f32[1,1], index: 8, kind: input, shape index: {}]
  %s9 = inlined_call_operand.hbm [shape: f32[1,512], index: 9, kind: output, shape index: {}]
  %s10 = sld [smem:[#allocation0]]
  $region69: #{tpu_custom_call.1} parent=0
    _
  %s12 = ssub.s32 1, %s10
  %s13 = scalar_select 0, %s12, %s10
  %14 = sst [smem:[#allocation2]] %s8
  $region1: #{tpu_custom_call.1} parent=0
    #allocation3 [shape = 'u8[2048]{0}', space=vmem, size = 0x800, scoped, tag = 'output window, operand 0']
    #allocation4 [shape = 's32[2]{0}', space=sflag, size = 0x8, scoped, tag = 'scoped memory for tpu_custom_call.1']
    %15 = vsyncpa [#allocation4], 0
    %s16 = scalar_lea.sflag [#allocation4], 1
    %17 = vsyncpa %s16, 0
    loop: start=0, step=1, limit=4
    $region2: #{tpu_custom_call.1} parent=1 // loop_pre_header
      _
    $region3: #{tpu_custom_call.1} parent=1 // loop_header
      %s19 = sphi 0, %s23
      %p20 = scmp.ge.s32.totalorder %s19, 4
      %s29 = sphi 0, %s31
      %s32 = sphi 0, %s29
      %s33 = sphi 0, %s32
      %s49 = sphi 0, %s33
      %s53 = sphi 0, %s53
      %s55 = sphi 0, %s53
      %s56 = sphi 0, %s55
      %s70 = sphi 0, %s56
      %s74 = sphi 0, %s74
      %s76 = sphi 0, %s74
      %s77 = sphi 0, %s76
      %s91 = sphi 0, %s77
      %s95 = sphi 0, %s95
      %s97 = sphi 0, %s95
      %s98 = sphi 0, %s97
      %s112 = sphi 0, %s98
      %s116 = sphi 0, %s116
      %s118 = sphi 0, %s116
      %s119 = sphi 0, %s118
      %s133 = sphi 0, %s119
      %s137 = sphi 0, %s137
      %s139 = sphi 0, %s137
      %s140 = sphi 0, %s139
      %s154 = sphi 0, %s140
      %s158 = sphi 0, %s158
      %s160 = sphi 0, %s158
      %s161 = sphi 0, %s160
      %s175 = sphi 0, %s161
      %s179 = sphi 0, %s179
      %s181 = sphi 0, %s179
      %s182 = sphi 0, %s181
      %s196 = sphi 0, %s182
      %s200 = sphi 0, %s200
      %s202 = sphi 0, %s200
      %s203 = sphi 0, %s202
      %s217 = sphi 0, %s203
      %s223 = sphi 0, %s225
      %s226 = sphi 0, %s223
      %s227 = sphi 0, %s226
      %s243 = sphi 0, %s227
    $region4: #{tpu_custom_call.1} parent=1 // loop_header_branch
      %22 = sbr.rel (%p20) target = $region8
    $region5: #{tpu_custom_call.1} parent=1 // loop_body
      %s24 = ssub.s32 %s19, 1
      %s25 = ssub.s32 %s19, 2
      %s26 = sadd.s32 %s19, 1
      %s27 = ssub.s32 %s19, %s26
      %p28 = scmp.eq.s32.totalorder %s27, 0
      %s30 = sadd.s32 %s29, 1
      %s31 = scalar_select %p28, %s29, %s30
      %p34 = pneg %p28
      %p35 = scmp.eq.s32.totalorder %s19, 1
      %p36 = por %p34, %p35
      %p37 = scmp.ne.s32.totalorder %s29, %s32
      %p38 = scmp.eq.s32.totalorder %s19, 0
      %p39 = por %p37, %p38
      %p40 = scmp.ne.s32.totalorder %s29, %s32
      %p41 = scmp.eq.s32.totalorder %s24, 1
      %p42 = por %p40, %p41
      %p43 = scmp.ne.s32.totalorder %s32, %s33
      %p44 = scmp.eq.s32.totalorder %s24, 0
      %p45 = por %p43, %p44
      %p46 = scmp.ne.s32.totalorder %s32, %s33
      %p47 = scmp.eq.s32.totalorder %s25, 1
      %p48 = por %p46, %p47
      %p50 = scmp.ne.s32.totalorder %s33, %s49
      %p51 = scmp.eq.s32.totalorder %s25, 0
      %p52 = por %p50, %p51
      %s54 = sadd.s32 %s53, 1
      %p57 = scmp.eq.s32.totalorder %s19, 1
      %p58 = scmp.ne.s32.totalorder %s53, %s55
      %p59 = scmp.eq.s32.totalorder %s19, 0
      %p60 = por %p58, %p59
      %p61 = scmp.ne.s32.totalorder %s53, %s55
      %p62 = scmp.eq.s32.totalorder %s24, 1
      %p63 = por %p61, %p62
      %p64 = scmp.ne.s32.totalorder %s55, %s56
      %p65 = scmp.eq.s32.totalorder %s24, 0
      %p66 = por %p64, %p65
      %p67 = scmp.ne.s32.totalorder %s55, %s56
      %p68 = scmp.eq.s32.totalorder %s25, 1
      %p69 = por %p67, %p68
      %p71 = scmp.ne.s32.totalorder %s56, %s70
      %p72 = scmp.eq.s32.totalorder %s25, 0
      %p73 = por %p71, %p72
      %s75 = sadd.s32 %s74, 1
      %p78 = scmp.eq.s32.totalorder %s19, 1
      %p79 = scmp.ne.s32.totalorder %s74, %s76
      %p80 = scmp.eq.s32.totalorder %s19, 0
      %p81 = por %p79, %p80
      %p82 = scmp.ne.s32.totalorder %s74, %s76
      %p83 = scmp.eq.s32.totalorder %s24, 1
      %p84 = por %p82, %p83
      %p85 = scmp.ne.s32.totalorder %s76, %s77
      %p86 = scmp.eq.s32.totalorder %s24, 0
      %p87 = por %p85, %p86
      %p88 = scmp.ne.s32.totalorder %s76, %s77
      %p89 = scmp.eq.s32.totalorder %s25, 1
      %p90 = por %p88, %p89
      %p92 = scmp.ne.s32.totalorder %s77, %s91
      %p93 = scmp.eq.s32.totalorder %s25, 0
      %p94 = por %p92, %p93
      %s96 = sadd.s32 %s95, 1
      %p99 = scmp.eq.s32.totalorder %s19, 1
      %p100 = scmp.ne.s32.totalorder %s95, %s97
      %p101 = scmp.eq.s32.totalorder %s19, 0
      %p102 = por %p100, %p101
      %p103 = scmp.ne.s32.totalorder %s95, %s97
      %p104 = scmp.eq.s32.totalorder %s24, 1
      %p105 = por %p103, %p104
      %p106 = scmp.ne.s32.totalorder %s97, %s98
      %p107 = scmp.eq.s32.totalorder %s24, 0
      %p108 = por %p106, %p107
      %p109 = scmp.ne.s32.totalorder %s97, %s98
      %p110 = scmp.eq.s32.totalorder %s25, 1
      %p111 = por %p109, %p110
      %p113 = scmp.ne.s32.totalorder %s98, %s112
      %p114 = scmp.eq.s32.totalorder %s25, 0
      %p115 = por %p113, %p114
      %s117 = sadd.s32 %s116, 1
      %p120 = scmp.eq.s32.totalorder %s19, 1
      %p121 = scmp.ne.s32.totalorder %s116, %s118
      %p122 = scmp.eq.s32.totalorder %s19, 0
      %p123 = por %p121, %p122
      %p124 = scmp.ne.s32.totalorder %s116, %s118
      %p125 = scmp.eq.s32.totalorder %s24, 1
      %p126 = por %p124, %p125
      %p127 = scmp.ne.s32.totalorder %s118, %s119
      %p128 = scmp.eq.s32.totalorder %s24, 0
      %p129 = por %p127, %p128
      %p130 = scmp.ne.s32.totalorder %s118, %s119
      %p131 = scmp.eq.s32.totalorder %s25, 1
      %p132 = por %p130, %p131
      %p134 = scmp.ne.s32.totalorder %s119, %s133
      %p135 = scmp.eq.s32.totalorder %s25, 0
      %p136 = por %p134, %p135
      %s138 = sadd.s32 %s137, 1
      %p141 = scmp.eq.s32.totalorder %s19, 1
      %p142 = scmp.ne.s32.totalorder %s137, %s139
      %p143 = scmp.eq.s32.totalorder %s19, 0
      %p144 = por %p142, %p143
      %p145 = scmp.ne.s32.totalorder %s137, %s139
      %p146 = scmp.eq.s32.totalorder %s24, 1
      %p147 = por %p145, %p146
      %p148 = scmp.ne.s32.totalorder %s139, %s140
      %p149 = scmp.eq.s32.totalorder %s24, 0
      %p150 = por %p148, %p149
      %p151 = scmp.ne.s32.totalorder %s139, %s140
      %p152 = scmp.eq.s32.totalorder %s25, 1
      %p153 = por %p151, %p152
      %p155 = scmp.ne.s32.totalorder %s140, %s154
      %p156 = scmp.eq.s32.totalorder %s25, 0
      %p157 = por %p155, %p156
      %s159 = sadd.s32 %s158, 1
      %p162 = scmp.eq.s32.totalorder %s19, 1
      %p163 = scmp.ne.s32.totalorder %s158, %s160
      %p164 = scmp.eq.s32.totalorder %s19, 0
      %p165 = por %p163, %p164
      %p166 = scmp.ne.s32.totalorder %s158, %s160
      %p167 = scmp.eq.s32.totalorder %s24, 1
      %p168 = por %p166, %p167
      %p169 = scmp.ne.s32.totalorder %s160, %s161
      %p170 = scmp.eq.s32.totalorder %s24, 0
      %p171 = por %p169, %p170
      %p172 = scmp.ne.s32.totalorder %s160, %s161
      %p173 = scmp.eq.s32.totalorder %s25, 1
      %p174 = por %p172, %p173
      %p176 = scmp.ne.s32.totalorder %s161, %s175
      %p177 = scmp.eq.s32.totalorder %s25, 0
      %p178 = por %p176, %p177
      %s180 = sadd.s32 %s179, 1
      %p183 = scmp.eq.s32.totalorder %s19, 1
      %p184 = scmp.ne.s32.totalorder %s179, %s181
      %p185 = scmp.eq.s32.totalorder %s19, 0
      %p186 = por %p184, %p185
      %p187 = scmp.ne.s32.totalorder %s179, %s181
      %p188 = scmp.eq.s32.totalorder %s24, 1
      %p189 = por %p187, %p188
      %p190 = scmp.ne.s32.totalorder %s181, %s182
      %p191 = scmp.eq.s32.totalorder %s24, 0
      %p192 = por %p190, %p191
      %p193 = scmp.ne.s32.totalorder %s181, %s182
      %p194 = scmp.eq.s32.totalorder %s25, 1
      %p195 = por %p193, %p194
      %p197 = scmp.ne.s32.totalorder %s182, %s196
      %p198 = scmp.eq.s32.totalorder %s25, 0
      %p199 = por %p197, %p198
      %s201 = sadd.s32 %s200, 1
      %p204 = scmp.eq.s32.totalorder %s19, 1
      %p205 = scmp.ne.s32.totalorder %s200, %s202
      %p206 = scmp.eq.s32.totalorder %s19, 0
      %p207 = por %p205, %p206
      %p208 = scmp.ne.s32.totalorder %s200, %s202
      %p209 = scmp.eq.s32.totalorder %s24, 1
      %p210 = por %p208, %p209
      %p211 = scmp.ne.s32.totalorder %s202, %s203
      %p212 = scmp.eq.s32.totalorder %s24, 0
      %p213 = por %p211, %p212
      %p214 = scmp.ne.s32.totalorder %s202, %s203
      %p215 = scmp.eq.s32.totalorder %s25, 1
      %p216 = por %p214, %p215
      %p218 = scmp.ne.s32.totalorder %s203, %s217
      %p219 = scmp.eq.s32.totalorder %s25, 0
      %p220 = por %p218, %p219
      %s221 = ssub.s32 %s19, %s26
      %p222 = scmp.eq.s32.totalorder %s221, 0
      %s224 = sadd.s32 %s223, 1
      %s225 = scalar_select %p222, %s223, %s224
      %p228 = pneg %p222
      %p229 = scmp.eq.s32.totalorder %s19, 1
      %p230 = por %p228, %p229
      %p231 = scmp.ne.s32.totalorder %s223, %s226
      %p232 = scmp.eq.s32.totalorder %s19, 0
      %p233 = por %p231, %p232
      %p234 = scmp.ne.s32.totalorder %s223, %s226
      %p235 = scmp.eq.s32.totalorder %s24, 1
      %p236 = por %p234, %p235
      %p237 = scmp.ne.s32.totalorder %s226, %s227
      %p238 = scmp.eq.s32.totalorder %s24, 0
      %p239 = por %p237, %p238
      %p240 = scmp.ne.s32.totalorder %s226, %s227
      %p241 = scmp.eq.s32.totalorder %s25, 1
      %p242 = por %p240, %p241
      %p244 = scmp.ne.s32.totalorder %s227, %s243
      %p245 = scmp.eq.s32.totalorder %s25, 0
      %p246 = por %p244, %p245
      %p247 = scmp.le.s32.totalorder 1, %s19
      %p248 = scmp.lt.s32.totalorder %s19, 3
      %p249 = pnand %p247, %p248
      %p250 = pneg %p249
      // Predicated region
      $region9: #{tpu_custom_call.1} parent=5 // pred_check
        _
      $region10: #{tpu_custom_call.1} parent=5 // pred_check_branch
        %252 = sbr.rel (%p249) target = $region12
      $region11: #{tpu_custom_call.1} parent=5 // pred_region
        %s253 = ssub.s32 %s19, 1
        // Predicated region
        $region13: #{tpu_custom_call.1} parent=11 // pred_check
          %p254 = pneg %p66
        $region14: #{tpu_custom_call.1} parent=11 // pred_check_branch
          %256 = sbr.rel (%p254) target = $region16
        $region15: #{tpu_custom_call.1} parent=11 // pred_region
          _
        $region16: #{tpu_custom_call.1} parent=11 // pred_fallthru
          _
        // Predicated region
        $region17: #{tpu_custom_call.1} parent=11 // pred_check
          %p257 = pneg %p87
        $region18: #{tpu_custom_call.1} parent=11 // pred_check_branch
          %259 = sbr.rel (%p257) target = $region20
        $region19: #{tpu_custom_call.1} parent=11 // pred_region
          _
        $region20: #{tpu_custom_call.1} parent=11 // pred_fallthru
          _
        // Predicated region
        $region21: #{tpu_custom_call.1} parent=11 // pred_check
          %p260 = pneg %p108
        $region22: #{tpu_custom_call.1} parent=11 // pred_check_branch
          %262 = sbr.rel (%p260) target = $region24
        $region23: #{tpu_custom_call.1} parent=11 // pred_region
          _
        $region24: #{tpu_custom_call.1} parent=11 // pred_fallthru
          _
        // Predicated region
        $region25: #{tpu_custom_call.1} parent=11 // pred_check
          %p263 = pneg %p129
        $region26: #{tpu_custom_call.1} parent=11 // pred_check_branch
          %265 = sbr.rel (%p263) target = $region28
        $region27: #{tpu_custom_call.1} parent=11 // pred_region
          _
        $region28: #{tpu_custom_call.1} parent=11 // pred_fallthru
          _
        // Predicated region
        $region29: #{tpu_custom_call.1} parent=11 // pred_check
          %p266 = pneg %p150
        $region30: #{tpu_custom_call.1} parent=11 // pred_check_branch
          %268 = sbr.rel (%p266) target = $region32
        $region31: #{tpu_custom_call.1} parent=11 // pred_region
          _
        $region32: #{tpu_custom_call.1} parent=11 // pred_fallthru
          _
        // Predicated region
        $region33: #{tpu_custom_call.1} parent=11 // pred_check
          %p269 = pneg %p171
        $region34: #{tpu_custom_call.1} parent=11 // pred_check_branch
          %271 = sbr.rel (%p269) target = $region36
        $region35: #{tpu_custom_call.1} parent=11 // pred_region
          _
        $region36: #{tpu_custom_call.1} parent=11 // pred_fallthru
          _
        // Predicated region
        $region37: #{tpu_custom_call.1} parent=11 // pred_check
          %p272 = pneg %p192
        $region38: #{tpu_custom_call.1} parent=11 // pred_check_branch
          %274 = sbr.rel (%p272) target = $region40
        $region39: #{tpu_custom_call.1} parent=11 // pred_region
          _
        $region40: #{tpu_custom_call.1} parent=11 // pred_fallthru
          _
        // Predicated region
        $region41: #{tpu_custom_call.1} parent=11 // pred_check
          %p275 = pneg %p213
        $region42: #{tpu_custom_call.1} parent=11 // pred_check_branch
          %277 = sbr.rel (%p275) target = $region44
        $region43: #{tpu_custom_call.1} parent=11 // pred_region
          _
        $region44: #{tpu_custom_call.1} parent=11 // pred_fallthru
          _
      $region12: #{tpu_custom_call.1} parent=5 // pred_fallthru
        _
      %p278 = scmp.lt.s32.totalorder %s19, 2
      // Predicated region
      $region45: #{tpu_custom_call.1} parent=5 // pred_check
        %p279 = pneg %p278
      $region46: #{tpu_custom_call.1} parent=5 // pred_check_branch
        %281 = sbr.rel (%p279) target = $region48
      $region47: #{tpu_custom_call.1} parent=5 // pred_region
        // Predicated region
        $region49: #{tpu_custom_call.1} parent=47 // pred_check
          %p282 = pneg %p39
        $region50: #{tpu_custom_call.1} parent=47 // pred_check_branch
          %284 = sbr.rel (%p282) target = $region52
        $region51: #{tpu_custom_call.1} parent=47 // pred_region
          %s285 = smul.u32 32, %s19
          %p286 = scmp.lt.s32.totalorder %s285, 63
          %s287 = scalar_select %p286, %s285, 63
          %s288 = smul.addr %s287, 8
          %s289 = scalar_lea.vmem %s0, %s288
          %s290 = smul.u32 32, %s19
        $region52: #{tpu_custom_call.1} parent=47 // pred_fallthru
          _
      $region48: #{tpu_custom_call.1} parent=5 // pred_fallthru
        _
      %p291 = scmp.le.s32.totalorder 1, %s19
      %p292 = scmp.lt.s32.totalorder %s19, 3
      %p293 = pnand %p291, %p292
      %p294 = pneg %p293
      // Predicated region
      $region53: #{tpu_custom_call.1} parent=5 // pred_check
        _
      $region54: #{tpu_custom_call.1} parent=5 // pred_check_branch
        %296 = sbr.rel (%p293) target = $region56
      $region55: #{tpu_custom_call.1} parent=5 // pred_region
        %s297 = ssub.s32 %s19, 1
        %s298 = smul.u32 32, %s24
        %p299 = scmp.lt.s32.totalorder %s298, 63
        %s300 = scalar_select %p299, %s298, 63
        %s301 = smul.addr %s300, 8
        %s302 = scalar_lea.vmem %s0, %s301
        %p303 = pneg %p45
        %p304 = pneg %p42
        %p305 = pneg %p66
        %p306 = pneg %p63
        %p307 = pneg %p87
        %p308 = pneg %p84
        %p309 = pneg %p108
        %p310 = pneg %p105
        %p311 = pneg %p129
        %p312 = pneg %p126
        %p313 = pneg %p150
        %p314 = pneg %p147
        %p315 = pneg %p171
        %p316 = pneg %p168
        %p317 = pneg %p192
        %p318 = pneg %p189
        %p319 = pneg %p213
        %p320 = pneg %p210
        %p321 = pneg %p239
        %p322 = pneg %p236
        %s323 = sand.u32 %s226, 1
        %s324 = scalar_lea.sflag [#allocation4], %s323
        %s325 = sand.u32 %s226, 1
        %s326 = smul.addr %s325, 2
        %s327 = scalar_lea.vmem [#allocation3], %s326
        %s328 = smul.u32 32, %s24
        %p329 = scmp.lt.s32.totalorder %s328, 63
        %s330 = scalar_select %p329, %s328, 63
        %s331 = smul.addr %s330, 8
        %s332 = scalar_lea.vmem %s0, %s331
        %s333 = smul.u32 32, %s24
        %s334 = smul.u32 2, %s24
        %v336 = vld [vmem:[%s332] sm:$0xff]
        %v337 = vld [vmem:[%s332 + $0x8] sm:$0xff]
        %v338 = vld [vmem:[%s332 + $0x10] sm:$0xff]
        %v339 = vld [vmem:[%s332 + $0x18] sm:$0xff]
        %v340 = vld [vmem:[%s332 + $0x20] sm:$0xff]
        %v341 = vld [vmem:[%s332 + $0x28] sm:$0xff]
        %v342 = vld [vmem:[%s332 + $0x30] sm:$0xff]
        %v343 = vld [vmem:[%s332 + $0x38] sm:$0xff]
        %v344 = vld [vmem:[%s332 + $0x40] sm:$0xff]
        %v345 = vld [vmem:[%s332 + $0x48] sm:$0xff]
        %v346 = vld [vmem:[%s332 + $0x50] sm:$0xff]
        %v347 = vld [vmem:[%s332 + $0x58] sm:$0xff]
        %v348 = vld [vmem:[%s332 + $0x60] sm:$0xff]
        %v349 = vld [vmem:[%s332 + $0x68] sm:$0xff]
        %v350 = vld [vmem:[%s332 + $0x70] sm:$0xff]
        %v351 = vld [vmem:[%s332 + $0x78] sm:$0xff]
        %v352 = vld [vmem:[%s332 + $0x80] sm:$0xff]
        %v353 = vld [vmem:[%s332 + $0x88] sm:$0xff]
        %v354 = vld [vmem:[%s332 + $0x90] sm:$0xff]
        %v355 = vld [vmem:[%s332 + $0x98] sm:$0xff]
        %v356 = vld [vmem:[%s332 + $0xa0] sm:$0xff]
        %v357 = vld [vmem:[%s332 + $0xa8] sm:$0xff]
        %v358 = vld [vmem:[%s332 + $0xb0] sm:$0xff]
        %v359 = vld [vmem:[%s332 + $0xb8] sm:$0xff]
        %v360 = vld [vmem:[%s332 + $0xc0] sm:$0xff]
        %v361 = vld [vmem:[%s332 + $0xc8] sm:$0xff]
        %v362 = vld [vmem:[%s332 + $0xd0] sm:$0xff]
        %v363 = vld [vmem:[%s332 + $0xd8] sm:$0xff]
        %v364 = vld [vmem:[%s332 + $0xe0] sm:$0xff]
        %v365 = vld [vmem:[%s332 + $0xe8] sm:$0xff]
        %v366 = vld [vmem:[%s332 + $0xf0] sm:$0xff]
        %v367 = vld [vmem:[%s332 + $0xf8] sm:$0xff]
        %v368 = vpack.c.bf16 %v337, %v336
        %v369 = vpack.c.bf16 %v339, %v338
        %v370 = vpack.c.bf16 %v341, %v340
        %v371 = vpack.c.bf16 %v343, %v342
        %v372 = vpack.c.bf16 %v345, %v344
        %v373 = vpack.c.bf16 %v347, %v346
        %v374 = vpack.c.bf16 %v349, %v348
        %v375 = vpack.c.bf16 %v351, %v350
        %v376 = vpack.c.bf16 %v353, %v352
        %v377 = vpack.c.bf16 %v355, %v354
        %v378 = vpack.c.bf16 %v357, %v356
        %v379 = vpack.c.bf16 %v359, %v358
        %v380 = vpack.c.bf16 %v361, %v360
        %v381 = vpack.c.bf16 %v363, %v362
        %v382 = vpack.c.bf16 %v365, %v364
        %v383 = vpack.c.bf16 %v367, %v366
        %v384 = vld [vmem:[%s1] sm:$0xf]
        %v385 = vld [vmem:[%s1 + $0x4] sm:$0xf]
        %v386 = vld [vmem:[%s1 + $0x8] sm:$0xf]
        %v387 = vld [vmem:[%s1 + $0xc] sm:$0xf]
        %v388 = vld [vmem:[%s2] sm:$0x1]
        %v390 = vlaneseq
        %v391 = vshrl.u32 %v390, 7
        %v392 = vsub.s32 0, %v391
        %v393 = vrot.slane %v388, %v392
        %v399 = vunpack.c.l.b16 %v384
        %v400 = vunpack.c.l.b16 %v385
        %v401 = vunpack.c.l.b16 %v386
        %v402 = vunpack.c.l.b16 %v387
        %v403 = vpack.c.b16 %v400, %v399
        %v404 = vpack.c.b16 %v402, %v401
        %vm407 = vcmask 261120
        %v409 = vsel %vm407, %v368, 0
        %v412 = vsel %vm407, %v369, 0
        %v415 = vsel %vm407, %v370, 0
        %v418 = vsel %vm407, %v371, 0
        %v421 = vsel %vm407, %v372, 0
        %v424 = vsel %vm407, %v373, 0
        %v427 = vsel %vm407, %v374, 0
        %v430 = vsel %vm407, %v375, 0
        %v433 = vsel %vm407, %v376, 0
        %v436 = vsel %vm407, %v377, 0
        %v439 = vsel %vm407, %v378, 0
        %v442 = vsel %vm407, %v379, 0
        %v445 = vsel %vm407, %v380, 0
        %v448 = vsel %vm407, %v381, 0
        %v451 = vsel %vm407, %v382, 0
        %v454 = vsel %vm407, %v383, 0
        %456 = vmatprep.subr.bf16.mxu0 0
        %457 = vmatpush1.bf16.msra.mxu0 %v403
        %458 = vmatprep.subr.bf16.mxu0 0
        %459 = vmatpush1.bf16.msra.mxu0 %v404
        %460 = vmatprep.subr.bf16.mxu0 0
        %461 = vmatpush1.bf16.msra.mxu0 0
        %462 = vmatprep.subr.bf16.mxu0 0
        %463 = vmatpush1.bf16.msra.mxu0 0
        %464 = vmatprep.subr.bf16.mxu0 0
        %465 = vmatpush1.bf16.msra.mxu0 0
        %466 = vmatprep.subr.bf16.mxu0 0
        %467 = vmatpush1.bf16.msra.mxu0 0
        %468 = vmatprep.subr.bf16.mxu0 0
        %469 = vmatpush1.bf16.msra.mxu0 0
        %470 = vmatprep.subr.bf16.mxu0 0
        %471 = vmatpush1.bf16.msra.mxu0 0
        %472 = vmatprep.subr.bf16.mxu0 0
        %473 = vmatpush1.bf16.msra.mxu0 0
        %474 = vmatprep.subr.bf16.mxu0 0
        %475 = vmatpush1.bf16.msra.mxu0 0
        %476 = vmatprep.subr.bf16.mxu0 0
        %477 = vmatpush1.bf16.msra.mxu0 0
        %478 = vmatprep.subr.bf16.mxu0 0
        %479 = vmatpush1.bf16.msra.mxu0 0
        %480 = vmatprep.subr.bf16.mxu0 0
        %481 = vmatpush1.bf16.msra.mxu0 0
        %482 = vmatprep.subr.bf16.mxu0 0
        %483 = vmatpush1.bf16.msra.mxu0 0
        %484 = vmatprep.subr.bf16.mxu0 0
        %485 = vmatpush1.bf16.msra.mxu0 0
        %486 = vmatprep.subr.bf16.mxu0 0
        %487 = vmatpush1.bf16.msra.mxu0 0
        %488 = vmatprep.mubr.bf16.mxu0 0
        %489 = vmatmul.mubr.bf16.gmra.mrb[0].mxu0 %v409
        %v490 = vpop.f32.mrb[0].mxu0
        %v491 = vadd.f32 %v393, %v490
        %v492 = vpop.f32.mrb[0].mxu0
        %v493 = vpop.f32.mrb[0].mxu0
        %v494 = vadd.f32 %v393, %v493
        %v495 = vpop.f32.mrb[0].mxu0
        %496 = vmatprep.mubr.bf16.mxu0 0
        %497 = vmatmul.mubr.bf16.gmra.mrb[0].mxu0 %v412
        %v498 = vpop.f32.mrb[0].mxu0
        %v499 = vadd.f32 %v393, %v498
        %v500 = vpop.f32.mrb[0].mxu0
        %v501 = vpop.f32.mrb[0].mxu0
        %v502 = vadd.f32 %v393, %v501
        %v503 = vpop.f32.mrb[0].mxu0
        %504 = vmatprep.mubr.bf16.mxu0 0
        %505 = vmatmul.mubr.bf16.gmra.mrb[0].mxu0 %v415
        %v506 = vpop.f32.mrb[0].mxu0
        %v507 = vadd.f32 %v393, %v506
        %v508 = vpop.f32.mrb[0].mxu0
        %v509 = vpop.f32.mrb[0].mxu0
        %v510 = vadd.f32 %v393, %v509
        %v511 = vpop.f32.mrb[0].mxu0
        %512 = vmatprep.mubr.bf16.mxu0 0
        %513 = vmatmul.mubr.bf16.gmra.mrb[0].mxu0 %v418
        %v514 = vpop.f32.mrb[0].mxu0
        %v515 = vadd.f32 %v393, %v514
        %v516 = vpop.f32.mrb[0].mxu0
        %v517 = vpop.f32.mrb[0].mxu0
        %v518 = vadd.f32 %v393, %v517
        %v519 = vpop.f32.mrb[0].mxu0
        %520 = vmatprep.mubr.bf16.mxu0 0
        %521 = vmatmul.mubr.bf16.gmra.mrb[0].mxu0 %v421
        %v522 = vpop.f32.mrb[0].mxu0
        %v523 = vadd.f32 %v393, %v522
        %v524 = vpop.f32.mrb[0].mxu0
        %v525 = vpop.f32.mrb[0].mxu0
        %v526 = vadd.f32 %v393, %v525
        %v527 = vpop.f32.mrb[0].mxu0
        %528 = vmatprep.mubr.bf16.mxu0 0
        %529 = vmatmul.mubr.bf16.gmra.mrb[0].mxu0 %v424
        %v530 = vpop.f32.mrb[0].mxu0
        %v531 = vadd.f32 %v393, %v530
        %v532 = vpop.f32.mrb[0].mxu0
        %v533 = vpop.f32.mrb[0].mxu0
        %v534 = vadd.f32 %v393, %v533
        %v535 = vpop.f32.mrb[0].mxu0
        %536 = vmatprep.mubr.bf16.mxu0 0
        %537 = vmatmul.mubr.bf16.gmra.mrb[0].mxu0 %v427
        %v538 = vpop.f32.mrb[0].mxu0
        %v539 = vadd.f32 %v393, %v538
        %v540 = vpop.f32.mrb[0].mxu0
        %v541 = vpop.f32.mrb[0].mxu0
        %v542 = vadd.f32 %v393, %v541
        %v543 = vpop.f32.mrb[0].mxu0
        %544 = vmatprep.mubr.bf16.mxu0 0
        %545 = vmatmul.mubr.bf16.gmra.mrb[0].mxu0 %v430
        %v546 = vpop.f32.mrb[0].mxu0
        %v547 = vadd.f32 %v393, %v546
        %v548 = vpop.f32.mrb[0].mxu0
        %v549 = vpop.f32.mrb[0].mxu0
        %v550 = vadd.f32 %v393, %v549
        %v551 = vpop.f32.mrb[0].mxu0
        %552 = vmatprep.mubr.bf16.mxu0 0
        %553 = vmatmul.mubr.bf16.gmra.mrb[0].mxu0 %v433
        %v554 = vpop.f32.mrb[0].mxu0
        %v555 = vadd.f32 %v393, %v554
        %v556 = vpop.f32.mrb[0].mxu0
        %v557 = vpop.f32.mrb[0].mxu0
        %v558 = vadd.f32 %v393, %v557
        %v559 = vpop.f32.mrb[0].mxu0
        %560 = vmatprep.mubr.bf16.mxu0 0
        %561 = vmatmul.mubr.bf16.gmra.mrb[0].mxu0 %v436
        %v562 = vpop.f32.mrb[0].mxu0
        %v563 = vadd.f32 %v393, %v562
        %v564 = vpop.f32.mrb[0].mxu0
        %v565 = vpop.f32.mrb[0].mxu0
        %v566 = vadd.f32 %v393, %v565
        %v567 = vpop.f32.mrb[0].mxu0
        %568 = vmatprep.mubr.bf16.mxu0 0
        %569 = vmatmul.mubr.bf16.gmra.mrb[0].mxu0 %v439
        %v570 = vpop.f32.mrb[0].mxu0
        %v571 = vadd.f32 %v393, %v570
        %v572 = vpop.f32.mrb[0].mxu0
        %v573 = vpop.f32.mrb[0].mxu0
        %v574 = vadd.f32 %v393, %v573
        %v575 = vpop.f32.mrb[0].mxu0
        %576 = vmatprep.mubr.bf16.mxu0 0
        %577 = vmatmul.mubr.bf16.gmra.mrb[0].mxu0 %v442
        %v578 = vpop.f32.mrb[0].mxu0
        %v579 = vadd.f32 %v393, %v578
        %v580 = vpop.f32.mrb[0].mxu0
        %v581 = vpop.f32.mrb[0].mxu0
        %v582 = vadd.f32 %v393, %v581
        %v583 = vpop.f32.mrb[0].mxu0
        %584 = vmatprep.mubr.bf16.mxu0 0
        %585 = vmatmul.mubr.bf16.gmra.mrb[0].mxu0 %v445
        %v586 = vpop.f32.mrb[0].mxu0
        %v587 = vadd.f32 %v393, %v586
        %v588 = vpop.f32.mrb[0].mxu0
        %v589 = vpop.f32.mrb[0].mxu0
        %v590 = vadd.f32 %v393, %v589
        %v591 = vpop.f32.mrb[0].mxu0
        %592 = vmatprep.mubr.bf16.mxu0 0
        %593 = vmatmul.mubr.bf16.gmra.mrb[0].mxu0 %v448
        %v594 = vpop.f32.mrb[0].mxu0
        %v595 = vadd.f32 %v393, %v594
        %v596 = vpop.f32.mrb[0].mxu0
        %v597 = vpop.f32.mrb[0].mxu0
        %v598 = vadd.f32 %v393, %v597
        %v599 = vpop.f32.mrb[0].mxu0
        %600 = vmatprep.mubr.bf16.mxu0 0
        %601 = vmatmul.mubr.bf16.gmra.mrb[0].mxu0 %v451
        %v602 = vpop.f32.mrb[0].mxu0
        %v603 = vadd.f32 %v393, %v602
        %v604 = vpop.f32.mrb[0].mxu0
        %v605 = vpop.f32.mrb[0].mxu0
        %v606 = vadd.f32 %v393, %v605
        %v607 = vpop.f32.mrb[0].mxu0
        %608 = vmatprep.mubr.bf16.mxu0 0
        %609 = vmatmul.mubr.bf16.gmra.mrb[0].mxu0 %v454
        %v610 = vpop.f32.mrb[0].mxu0
        %v611 = vadd.f32 %v393, %v610
        %v612 = vpop.f32.mrb[0].mxu0
        %v613 = vpop.f32.mrb[0].mxu0
        %v614 = vadd.f32 %v393, %v613
        %v615 = vpop.f32.mrb[0].mxu0
        %616 = vdwg.mxu0
        %v617 = vmax.f32 %v491, 0.0
        %v618 = vmax.f32 %v494, 0.0
        %v619 = vmax.f32 %v499, 0.0
        %v620 = vmax.f32 %v502, 0.0
        %v621 = vmax.f32 %v507, 0.0
        %v622 = vmax.f32 %v510, 0.0
        %v623 = vmax.f32 %v515, 0.0
        %v624 = vmax.f32 %v518, 0.0
        %v625 = vmax.f32 %v523, 0.0
        %v626 = vmax.f32 %v526, 0.0
        %v627 = vmax.f32 %v531, 0.0
        %v628 = vmax.f32 %v534, 0.0
        %v629 = vmax.f32 %v539, 0.0
        %v630 = vmax.f32 %v542, 0.0
        %v631 = vmax.f32 %v547, 0.0
        %v632 = vmax.f32 %v550, 0.0
        %v633 = vmax.f32 %v555, 0.0
        %v634 = vmax.f32 %v558, 0.0
        %v635 = vmax.f32 %v563, 0.0
        %v636 = vmax.f32 %v566, 0.0
        %v637 = vmax.f32 %v571, 0.0
        %v638 = vmax.f32 %v574, 0.0
        %v639 = vmax.f32 %v579, 0.0
        %v640 = vmax.f32 %v582, 0.0
        %v641 = vmax.f32 %v587, 0.0
        %v642 = vmax.f32 %v590, 0.0
        %v643 = vmax.f32 %v595, 0.0
        %v644 = vmax.f32 %v598, 0.0
        %v645 = vmax.f32 %v603, 0.0
        %v646 = vmax.f32 %v606, 0.0
        %v647 = vmax.f32 %v611, 0.0
        %v648 = vmax.f32 %v614, 0.0
        %v649 = vpack.c.bf16 %v618, %v617
        %v650 = vpack.c.bf16 %v620, %v619
        %v651 = vpack.c.bf16 %v622, %v621
        %v652 = vpack.c.bf16 %v624, %v623
        %v653 = vpack.c.bf16 %v626, %v625
        %v654 = vpack.c.bf16 %v628, %v627
        %v655 = vpack.c.bf16 %v630, %v629
        %v656 = vpack.c.bf16 %v632, %v631
        %v657 = vpack.c.bf16 %v634, %v633
        %v658 = vpack.c.bf16 %v636, %v635
        %v659 = vpack.c.bf16 %v638, %v637
        %v660 = vpack.c.bf16 %v640, %v639
        %v661 = vpack.c.bf16 %v642, %v641
        %v662 = vpack.c.bf16 %v644, %v643
        %v663 = vpack.c.bf16 %v646, %v645
        %v664 = vpack.c.bf16 %v648, %v647
        %v665 = vld [vmem:[%s3] sm:$0xf]
        %v666 = vld [vmem:[%s3 + $0x4] sm:$0xf]
        %v667 = vld [vmem:[%s3 + $0x8] sm:$0xf]
        %v668 = vld [vmem:[%s3 + $0xc] sm:$0xf]
        %v669 = vld [vmem:[%s3 + $0x10] sm:$0xf]
        %v670 = vld [vmem:[%s3 + $0x14] sm:$0xf]
        %v671 = vld [vmem:[%s3 + $0x18] sm:$0xf]
        %v672 = vld [vmem:[%s3 + $0x1c] sm:$0xf]
        %v673 = vld [vmem:[%s3 + $0x20] sm:$0xf]
        %v674 = vld [vmem:[%s3 + $0x24] sm:$0xf]
        %v675 = vld [vmem:[%s3 + $0x28] sm:$0xf]
        %v676 = vld [vmem:[%s3 + $0x2c] sm:$0xf]
        %v677 = vld [vmem:[%s3 + $0x30] sm:$0xf]
        %v678 = vld [vmem:[%s3 + $0x34] sm:$0xf]
        %v679 = vld [vmem:[%s3 + $0x38] sm:$0xf]
        %v680 = vld [vmem:[%s3 + $0x3c] sm:$0xf]
        %v681 = vld [vmem:[%s4] sm:$0x1]
        %v683 = vlaneseq
        %v684 = vshrl.u32 %v683, 7
        %v685 = vsub.s32 0, %v684
        %v686 = vrot.slane %v681, %v685
        %v704 = vunpack.c.l.b16 %v665
        %v705 = vunpack.c.l.b16 %v666
        %v706 = vunpack.c.l.b16 %v667
        %v707 = vunpack.c.l.b16 %v668
        %v708 = vunpack.c.l.b16 %v669
        %v709 = vunpack.c.l.b16 %v670
        %v710 = vunpack.c.l.b16 %v671
        %v711 = vunpack.c.l.b16 %v672
        %v712 = vunpack.c.l.b16 %v673
        %v713 = vunpack.c.l.b16 %v674
        %v714 = vunpack.c.l.b16 %v675
        %v715 = vunpack.c.l.b16 %v676
        %v716 = vunpack.c.l.b16 %v677
        %v717 = vunpack.c.l.b16 %v678
        %v718 = vunpack.c.l.b16 %v679
        %v719 = vunpack.c.l.b16 %v680
        %v720 = vpack.c.b16 %v705, %v704
        %v721 = vpack.c.b16 %v707, %v706
        %v722 = vpack.c.b16 %v709, %v708
        %v723 = vpack.c.b16 %v711, %v710
        %v724 = vpack.c.b16 %v713, %v712
        %v725 = vpack.c.b16 %v715, %v714
        %v726 = vpack.c.b16 %v717, %v716
        %v727 = vpack.c.b16 %v719, %v718
        %736 = vmatprep.subr.bf16.mxu0 0
        %737 = vmatpush1.bf16.msra.mxu0 %v720
        %738 = vmatprep.subr.bf16.mxu0 0
        %739 = vmatpush1.bf16.msra.mxu0 %v721
        %740 = vmatprep.subr.bf16.mxu0 0
        %741 = vmatpush1.bf16.msra.mxu0 %v722
        %742 = vmatprep.subr.bf16.mxu0 0
        %743 = vmatpush1.bf16.msra.mxu0 %v723
        %744 = vmatprep.subr.bf16.mxu0 0
        %745 = vmatpush1.bf16.msra.mxu0 %v724
        %746 = vmatprep.subr.bf16.mxu0 0
        %747 = vmatpush1.bf16.msra.mxu0 %v725
        %748 = vmatprep.subr.bf16.mxu0 0
        %749 = vmatpush1.bf16.msra.mxu0 %v726
        %750 = vmatprep.subr.bf16.mxu0 0
        %751 = vmatpush1.bf16.msra.mxu0 %v727
        %752 = vmatprep.subr.bf16.mxu0 0
        %753 = vmatpush1.bf16.msra.mxu0 0
        %754 = vmatprep.subr.bf16.mxu0 0
        %755 = vmatpush1.bf16.msra.mxu0 0
        %756 = vmatprep.subr.bf16.mxu0 0
        %757 = vmatpush1.bf16.msra.mxu0 0
        %758 = vmatprep.subr.bf16.mxu0 0
        %759 = vmatpush1.bf16.msra.mxu0 0
        %760 = vmatprep.subr.bf16.mxu0 0
        %761 = vmatpush1.bf16.msra.mxu0 0
        %762 = vmatprep.subr.bf16.mxu0 0
        %763 = vmatpush1.bf16.msra.mxu0 0
        %764 = vmatprep.subr.bf16.mxu0 0
        %765 = vmatpush1.bf16.msra.mxu0 0
        %766 = vmatprep.subr.bf16.mxu0 0
        %767 = vmatpush1.bf16.msra.mxu0 0
        %768 = vmatprep.mubr.bf16.mxu0 0
        %769 = vmatmul.mubr.bf16.gmra.mrb[0].mxu0 %v649
        %v770 = vpop.f32.mrb[0].mxu0
        %v771 = vadd.f32 %v686, %v770
        %v772 = vpop.f32.mrb[0].mxu0
        %v773 = vpop.f32.mrb[0].mxu0
        %v774 = vadd.f32 %v686, %v773
        %v775 = vpop.f32.mrb[0].mxu0
        %776 = vmatprep.mubr.bf16.mxu0 0
        %777 = vmatmul.mubr.bf16.gmra.mrb[0].mxu0 %v650
        %v778 = vpop.f32.mrb[0].mxu0
        %v779 = vadd.f32 %v686, %v778
        %v780 = vpop.f32.mrb[0].mxu0
        %v781 = vpop.f32.mrb[0].mxu0
        %v782 = vadd.f32 %v686, %v781
        %v783 = vpop.f32.mrb[0].mxu0
        %784 = vmatprep.mubr.bf16.mxu0 0
        %785 = vmatmul.mubr.bf16.gmra.mrb[0].mxu0 %v651
        %v786 = vpop.f32.mrb[0].mxu0
        %v787 = vadd.f32 %v686, %v786
        %v788 = vpop.f32.mrb[0].mxu0
        %v789 = vpop.f32.mrb[0].mxu0
        %v790 = vadd.f32 %v686, %v789
        %v791 = vpop.f32.mrb[0].mxu0
        %792 = vmatprep.mubr.bf16.mxu0 0
        %793 = vmatmul.mubr.bf16.gmra.mrb[0].mxu0 %v652
        %v794 = vpop.f32.mrb[0].mxu0
        %v795 = vadd.f32 %v686, %v794
        %v796 = vpop.f32.mrb[0].mxu0
        %v797 = vpop.f32.mrb[0].mxu0
        %v798 = vadd.f32 %v686, %v797
        %v799 = vpop.f32.mrb[0].mxu0
        %800 = vmatprep.mubr.bf16.mxu0 0
        %801 = vmatmul.mubr.bf16.gmra.mrb[0].mxu0 %v653
        %v802 = vpop.f32.mrb[0].mxu0
        %v803 = vadd.f32 %v686, %v802
        %v804 = vpop.f32.mrb[0].mxu0
        %v805 = vpop.f32.mrb[0].mxu0
        %v806 = vadd.f32 %v686, %v805
        %v807 = vpop.f32.mrb[0].mxu0
        %808 = vmatprep.mubr.bf16.mxu0 0
        %809 = vmatmul.mubr.bf16.gmra.mrb[0].mxu0 %v654
        %v810 = vpop.f32.mrb[0].mxu0
        %v811 = vadd.f32 %v686, %v810
        %v812 = vpop.f32.mrb[0].mxu0
        %v813 = vpop.f32.mrb[0].mxu0
        %v814 = vadd.f32 %v686, %v813
        %v815 = vpop.f32.mrb[0].mxu0
        %816 = vmatprep.mubr.bf16.mxu0 0
        %817 = vmatmul.mubr.bf16.gmra.mrb[0].mxu0 %v655
        %v818 = vpop.f32.mrb[0].mxu0
        %v819 = vadd.f32 %v686, %v818
        %v820 = vpop.f32.mrb[0].mxu0
        %v821 = vpop.f32.mrb[0].mxu0
        %v822 = vadd.f32 %v686, %v821
        %v823 = vpop.f32.mrb[0].mxu0
        %824 = vmatprep.mubr.bf16.mxu0 0
        %825 = vmatmul.mubr.bf16.gmra.mrb[0].mxu0 %v656
        %v826 = vpop.f32.mrb[0].mxu0
        %v827 = vadd.f32 %v686, %v826
        %v828 = vpop.f32.mrb[0].mxu0
        %v829 = vpop.f32.mrb[0].mxu0
        %v830 = vadd.f32 %v686, %v829
        %v831 = vpop.f32.mrb[0].mxu0
        %832 = vmatprep.mubr.bf16.mxu0 0
        %833 = vmatmul.mubr.bf16.gmra.mrb[0].mxu0 %v657
        %v834 = vpop.f32.mrb[0].mxu0
        %v835 = vadd.f32 %v686, %v834
        %v836 = vpop.f32.mrb[0].mxu0
        %v837 = vpop.f32.mrb[0].mxu0
        %v838 = vadd.f32 %v686, %v837
        %v839 = vpop.f32.mrb[0].mxu0
        %840 = vmatprep.mubr.bf16.mxu0 0
        %841 = vmatmul.mubr.bf16.gmra.mrb[0].mxu0 %v658
        %v842 = vpop.f32.mrb[0].mxu0
        %v843 = vadd.f32 %v686, %v842
        %v844 = vpop.f32.mrb[0].mxu0
        %v845 = vpop.f32.mrb[0].mxu0
        %v846 = vadd.f32 %v686, %v845
        %v847 = vpop.f32.mrb[0].mxu0
        %848 = vmatprep.mubr.bf16.mxu0 0
        %849 = vmatmul.mubr.bf16.gmra.mrb[0].mxu0 %v659
        %v850 = vpop.f32.mrb[0].mxu0
        %v851 = vadd.f32 %v686, %v850
        %v852 = vpop.f32.mrb[0].mxu0
        %v853 = vpop.f32.mrb[0].mxu0
        %v854 = vadd.f32 %v686, %v853
        %v855 = vpop.f32.mrb[0].mxu0
        %856 = vmatprep.mubr.bf16.mxu0 0
        %857 = vmatmul.mubr.bf16.gmra.mrb[0].mxu0 %v660
        %v858 = vpop.f32.mrb[0].mxu0
        %v859 = vadd.f32 %v686, %v858
        %v860 = vpop.f32.mrb[0].mxu0
        %v861 = vpop.f32.mrb[0].mxu0
        %v862 = vadd.f32 %v686, %v861
        %v863 = vpop.f32.mrb[0].mxu0
        %864 = vmatprep.mubr.bf16.mxu0 0
        %865 = vmatmul.mubr.bf16.gmra.mrb[0].mxu0 %v661
        %v866 = vpop.f32.mrb[0].mxu0
        %v867 = vadd.f32 %v686, %v866
        %v868 = vpop.f32.mrb[0].mxu0
        %v869 = vpop.f32.mrb[0].mxu0
        %v870 = vadd.f32 %v686, %v869
        %v871 = vpop.f32.mrb[0].mxu0
        %872 = vmatprep.mubr.bf16.mxu0 0
        %873 = vmatmul.mubr.bf16.gmra.mrb[0].mxu0 %v662
        %v874 = vpop.f32.mrb[0].mxu0
        %v875 = vadd.f32 %v686, %v874
        %v876 = vpop.f32.mrb[0].mxu0
        %v877 = vpop.f32.mrb[0].mxu0
        %v878 = vadd.f32 %v686, %v877
        %v879 = vpop.f32.mrb[0].mxu0
        %880 = vmatprep.mubr.bf16.mxu0 0
        %881 = vmatmul.mubr.bf16.gmra.mrb[0].mxu0 %v663
        %v882 = vpop.f32.mrb[0].mxu0
        %v883 = vadd.f32 %v686, %v882
        %v884 = vpop.f32.mrb[0].mxu0
        %v885 = vpop.f32.mrb[0].mxu0
        %v886 = vadd.f32 %v686, %v885
        %v887 = vpop.f32.mrb[0].mxu0
        %888 = vmatprep.mubr.bf16.mxu0 0
        %889 = vmatmul.mubr.bf16.gmra.mrb[0].mxu0 %v664
        %v890 = vpop.f32.mrb[0].mxu0
        %v891 = vadd.f32 %v686, %v890
        %v892 = vpop.f32.mrb[0].mxu0
        %v893 = vpop.f32.mrb[0].mxu0
        %v894 = vadd.f32 %v686, %v893
        %v895 = vpop.f32.mrb[0].mxu0
        %896 = vdwg.mxu0
        %v897 = vmax.f32 %v771, 0.0
        %v898 = vmax.f32 %v774, 0.0
        %v899 = vmax.f32 %v779, 0.0
        %v900 = vmax.f32 %v782, 0.0
        %v901 = vmax.f32 %v787, 0.0
        %v902 = vmax.f32 %v790, 0.0
        %v903 = vmax.f32 %v795, 0.0
        %v904 = vmax.f32 %v798, 0.0
        %v905 = vmax.f32 %v803, 0.0
        %v906 = vmax.f32 %v806, 0.0
        %v907 = vmax.f32 %v811, 0.0
        %v908 = vmax.f32 %v814, 0.0
        %v909 = vmax.f32 %v819, 0.0
        %v910 = vmax.f32 %v822, 0.0
        %v911 = vmax.f32 %v827, 0.0
        %v912 = vmax.f32 %v830, 0.0
        %v913 = vmax.f32 %v835, 0.0
        %v914 = vmax.f32 %v838, 0.0
        %v915 = vmax.f32 %v843, 0.0
        %v916 = vmax.f32 %v846, 0.0
        %v917 = vmax.f32 %v851, 0.0
        %v918 = vmax.f32 %v854, 0.0
        %v919 = vmax.f32 %v859, 0.0
        %v920 = vmax.f32 %v862, 0.0
        %v921 = vmax.f32 %v867, 0.0
        %v922 = vmax.f32 %v870, 0.0
        %v923 = vmax.f32 %v875, 0.0
        %v924 = vmax.f32 %v878, 0.0
        %v925 = vmax.f32 %v883, 0.0
        %v926 = vmax.f32 %v886, 0.0
        %v927 = vmax.f32 %v891, 0.0
        %v928 = vmax.f32 %v894, 0.0
        %v929 = vpack.c.bf16 %v898, %v897
        %v930 = vpack.c.bf16 %v900, %v899
        %v931 = vpack.c.bf16 %v902, %v901
        %v932 = vpack.c.bf16 %v904, %v903
        %v933 = vpack.c.bf16 %v906, %v905
        %v934 = vpack.c.bf16 %v908, %v907
        %v935 = vpack.c.bf16 %v910, %v909
        %v936 = vpack.c.bf16 %v912, %v911
        %v937 = vpack.c.bf16 %v914, %v913
        %v938 = vpack.c.bf16 %v916, %v915
        %v939 = vpack.c.bf16 %v918, %v917
        %v940 = vpack.c.bf16 %v920, %v919
        %v941 = vpack.c.bf16 %v922, %v921
        %v942 = vpack.c.bf16 %v924, %v923
        %v943 = vpack.c.bf16 %v926, %v925
        %v944 = vpack.c.bf16 %v928, %v927
        %v945 = vld [vmem:[%s5] sm:$0xf]
        %v946 = vld [vmem:[%s5 + $0x4] sm:$0xf]
        %v947 = vld [vmem:[%s5 + $0x8] sm:$0xf]
        %v948 = vld [vmem:[%s5 + $0xc] sm:$0xf]
        %v949 = vld [vmem:[%s5 + $0x10] sm:$0xf]
        %v950 = vld [vmem:[%s5 + $0x14] sm:$0xf]
        %v951 = vld [vmem:[%s5 + $0x18] sm:$0xf]
        %v952 = vld [vmem:[%s5 + $0x1c] sm:$0xf]
        %v953 = vld [vmem:[%s6] sm:$0x1]
        %v955 = vlaneseq
        %v956 = vshrl.u32 %v955, 7
        %v957 = vsub.s32 0, %v956
        %v958 = vrot.slane %v953, %v957
        %v968 = vunpack.c.l.b16 %v945
        %v969 = vunpack.c.l.b16 %v946
        %v970 = vunpack.c.l.b16 %v947
        %v971 = vunpack.c.l.b16 %v948
        %v972 = vunpack.c.l.b16 %v949
        %v973 = vunpack.c.l.b16 %v950
        %v974 = vunpack.c.l.b16 %v951
        %v975 = vunpack.c.l.b16 %v952
        %v976 = vpack.c.b16 %v969, %v968
        %v977 = vpack.c.b16 %v971, %v970
        %v978 = vpack.c.b16 %v973, %v972
        %v979 = vpack.c.b16 %v975, %v974
        %vm984 = vcmask 523264
        %v986 = vsel %vm984, %v929, 0
        %v989 = vsel %vm984, %v930, 0
        %v992 = vsel %vm984, %v931, 0
        %v995 = vsel %vm984, %v932, 0
        %v998 = vsel %vm984, %v933, 0
        %v1001 = vsel %vm984, %v934, 0
        %v1004 = vsel %vm984, %v935, 0
        %v1007 = vsel %vm984, %v936, 0
        %v1010 = vsel %vm984, %v937, 0
        %v1013 = vsel %vm984, %v938, 0
        %v1016 = vsel %vm984, %v939, 0
        %v1019 = vsel %vm984, %v940, 0
        %v1022 = vsel %vm984, %v941, 0
        %v1025 = vsel %vm984, %v942, 0
        %v1028 = vsel %vm984, %v943, 0
        %v1031 = vsel %vm984, %v944, 0
        %1033 = vmatprep.subr.bf16.mxu0 0
        %1034 = vmatpush1.bf16.msra.mxu0 %v976
        %1035 = vmatprep.subr.bf16.mxu0 0
        %1036 = vmatpush1.bf16.msra.mxu0 %v977
        %1037 = vmatprep.subr.bf16.mxu0 0
        %1038 = vmatpush1.bf16.msra.mxu0 %v978
        %1039 = vmatprep.subr.bf16.mxu0 0
        %1040 = vmatpush1.bf16.msra.mxu0 %v979
        %1041 = vmatprep.subr.bf16.mxu0 0
        %1042 = vmatpush1.bf16.msra.mxu0 0
        %1043 = vmatprep.subr.bf16.mxu0 0
        %1044 = vmatpush1.bf16.msra.mxu0 0
        %1045 = vmatprep.subr.bf16.mxu0 0
        %1046 = vmatpush1.bf16.msra.mxu0 0
        %1047 = vmatprep.subr.bf16.mxu0 0
        %1048 = vmatpush1.bf16.msra.mxu0 0
        %1049 = vmatprep.subr.bf16.mxu0 0
        %1050 = vmatpush1.bf16.msra.mxu0 0
        %1051 = vmatprep.subr.bf16.mxu0 0
        %1052 = vmatpush1.bf16.msra.mxu0 0
        %1053 = vmatprep.subr.bf16.mxu0 0
        %1054 = vmatpush1.bf16.msra.mxu0 0
        %1055 = vmatprep.subr.bf16.mxu0 0
        %1056 = vmatpush1.bf16.msra.mxu0 0
        %1057 = vmatprep.subr.bf16.mxu0 0
        %1058 = vmatpush1.bf16.msra.mxu0 0
        %1059 = vmatprep.subr.bf16.mxu0 0
        %1060 = vmatpush1.bf16.msra.mxu0 0
        %1061 = vmatprep.subr.bf16.mxu0 0
        %1062 = vmatpush1.bf16.msra.mxu0 0
        %1063 = vmatprep.subr.bf16.mxu0 0
        %1064 = vmatpush1.bf16.msra.mxu0 0
        %1065 = vmatprep.mubr.bf16.mxu0 0
        %1066 = vmatmul.mubr.bf16.gmra.mrb[0].mxu0 %v986
        %v1067 = vpop.f32.mrb[0].mxu0
        %v1068 = vadd.f32 %v958, %v1067
        %v1069 = vpop.f32.mrb[0].mxu0
        %v1070 = vpop.f32.mrb[0].mxu0
        %v1071 = vadd.f32 %v958, %v1070
        %v1072 = vpop.f32.mrb[0].mxu0
        %1073 = vmatprep.mubr.bf16.mxu0 0
        %1074 = vmatmul.mubr.bf16.gmra.mrb[0].mxu0 %v989
        %v1075 = vpop.f32.mrb[0].mxu0
        %v1076 = vadd.f32 %v958, %v1075
        %v1077 = vpop.f32.mrb[0].mxu0
        %v1078 = vpop.f32.mrb[0].mxu0
        %v1079 = vadd.f32 %v958, %v1078
        %v1080 = vpop.f32.mrb[0].mxu0
        %1081 = vmatprep.mubr.bf16.mxu0 0
        %1082 = vmatmul.mubr.bf16.gmra.mrb[0].mxu0 %v992
        %v1083 = vpop.f32.mrb[0].mxu0
        %v1084 = vadd.f32 %v958, %v1083
        %v1085 = vpop.f32.mrb[0].mxu0
        %v1086 = vpop.f32.mrb[0].mxu0
        %v1087 = vadd.f32 %v958, %v1086
        %v1088 = vpop.f32.mrb[0].mxu0
        %1089 = vmatprep.mubr.bf16.mxu0 0
        %1090 = vmatmul.mubr.bf16.gmra.mrb[0].mxu0 %v995
        %v1091 = vpop.f32.mrb[0].mxu0
        %v1092 = vadd.f32 %v958, %v1091
        %v1093 = vpop.f32.mrb[0].mxu0
        %v1094 = vpop.f32.mrb[0].mxu0
        %v1095 = vadd.f32 %v958, %v1094
        %v1096 = vpop.f32.mrb[0].mxu0
        %1097 = vmatprep.mubr.bf16.mxu0 0
        %1098 = vmatmul.mubr.bf16.gmra.mrb[0].mxu0 %v998
        %v1099 = vpop.f32.mrb[0].mxu0
        %v1100 = vadd.f32 %v958, %v1099
        %v1101 = vpop.f32.mrb[0].mxu0
        %v1102 = vpop.f32.mrb[0].mxu0
        %v1103 = vadd.f32 %v958, %v1102
        %v1104 = vpop.f32.mrb[0].mxu0
        %1105 = vmatprep.mubr.bf16.mxu0 0
        %1106 = vmatmul.mubr.bf16.gmra.mrb[0].mxu0 %v1001
        %v1107 = vpop.f32.mrb[0].mxu0
        %v1108 = vadd.f32 %v958, %v1107
        %v1109 = vpop.f32.mrb[0].mxu0
        %v1110 = vpop.f32.mrb[0].mxu0
        %v1111 = vadd.f32 %v958, %v1110
        %v1112 = vpop.f32.mrb[0].mxu0
        %1113 = vmatprep.mubr.bf16.mxu0 0
        %1114 = vmatmul.mubr.bf16.gmra.mrb[0].mxu0 %v1004
        %v1115 = vpop.f32.mrb[0].mxu0
        %v1116 = vadd.f32 %v958, %v1115
        %v1117 = vpop.f32.mrb[0].mxu0
        %v1118 = vpop.f32.mrb[0].mxu0
        %v1119 = vadd.f32 %v958, %v1118
        %v1120 = vpop.f32.mrb[0].mxu0
        %1121 = vmatprep.mubr.bf16.mxu0 0
        %1122 = vmatmul.mubr.bf16.gmra.mrb[0].mxu0 %v1007
        %v1123 = vpop.f32.mrb[0].mxu0
        %v1124 = vadd.f32 %v958, %v1123
        %v1125 = vpop.f32.mrb[0].mxu0
        %v1126 = vpop.f32.mrb[0].mxu0
        %v1127 = vadd.f32 %v958, %v1126
        %v1128 = vpop.f32.mrb[0].mxu0
        %1129 = vmatprep.mubr.bf16.mxu0 0
        %1130 = vmatmul.mubr.bf16.gmra.mrb[0].mxu0 %v1010
        %v1131 = vpop.f32.mrb[0].mxu0
        %v1132 = vadd.f32 %v958, %v1131
        %v1133 = vpop.f32.mrb[0].mxu0
        %v1134 = vpop.f32.mrb[0].mxu0
        %v1135 = vadd.f32 %v958, %v1134
        %v1136 = vpop.f32.mrb[0].mxu0
        %1137 = vmatprep.mubr.bf16.mxu0 0
        %1138 = vmatmul.mubr.bf16.gmra.mrb[0].mxu0 %v1013
        %v1139 = vpop.f32.mrb[0].mxu0
        %v1140 = vadd.f32 %v958, %v1139
        %v1141 = vpop.f32.mrb[0].mxu0
        %v1142 = vpop.f32.mrb[0].mxu0
        %v1143 = vadd.f32 %v958, %v1142
        %v1144 = vpop.f32.mrb[0].mxu0
        %1145 = vmatprep.mubr.bf16.mxu0 0
        %1146 = vmatmul.mubr.bf16.gmra.mrb[0].mxu0 %v1016
        %v1147 = vpop.f32.mrb[0].mxu0
        %v1148 = vadd.f32 %v958, %v1147
        %v1149 = vpop.f32.mrb[0].mxu0
        %v1150 = vpop.f32.mrb[0].mxu0
        %v1151 = vadd.f32 %v958, %v1150
        %v1152 = vpop.f32.mrb[0].mxu0
        %1153 = vmatprep.mubr.bf16.mxu0 0
        %1154 = vmatmul.mubr.bf16.gmra.mrb[0].mxu0 %v1019
        %v1155 = vpop.f32.mrb[0].mxu0
        %v1156 = vadd.f32 %v958, %v1155
        %v1157 = vpop.f32.mrb[0].mxu0
        %v1158 = vpop.f32.mrb[0].mxu0
        %v1159 = vadd.f32 %v958, %v1158
        %v1160 = vpop.f32.mrb[0].mxu0
        %1161 = vmatprep.mubr.bf16.mxu0 0
        %1162 = vmatmul.mubr.bf16.gmra.mrb[0].mxu0 %v1022
        %v1163 = vpop.f32.mrb[0].mxu0
        %v1164 = vadd.f32 %v958, %v1163
        %v1165 = vpop.f32.mrb[0].mxu0
        %v1166 = vpop.f32.mrb[0].mxu0
        %v1167 = vadd.f32 %v958, %v1166
        %v1168 = vpop.f32.mrb[0].mxu0
        %1169 = vmatprep.mubr.bf16.mxu0 0
        %1170 = vmatmul.mubr.bf16.gmra.mrb[0].mxu0 %v1025
        %v1171 = vpop.f32.mrb[0].mxu0
        %v1172 = vadd.f32 %v958, %v1171
        %v1173 = vpop.f32.mrb[0].mxu0
        %v1174 = vpop.f32.mrb[0].mxu0
        %v1175 = vadd.f32 %v958, %v1174
        %v1176 = vpop.f32.mrb[0].mxu0
        %1177 = vmatprep.mubr.bf16.mxu0 0
        %1178 = vmatmul.mubr.bf16.gmra.mrb[0].mxu0 %v1028
        %v1179 = vpop.f32.mrb[0].mxu0
        %v1180 = vadd.f32 %v958, %v1179
        %v1181 = vpop.f32.mrb[0].mxu0
        %v1182 = vpop.f32.mrb[0].mxu0
        %v1183 = vadd.f32 %v958, %v1182
        %v1184 = vpop.f32.mrb[0].mxu0
        %1185 = vmatprep.mubr.bf16.mxu0 0
        %1186 = vmatmul.mubr.bf16.gmra.mrb[0].mxu0 %v1031
        %v1187 = vpop.f32.mrb[0].mxu0
        %v1188 = vadd.f32 %v958, %v1187
        %v1189 = vpop.f32.mrb[0].mxu0
        %v1190 = vpop.f32.mrb[0].mxu0
        %v1191 = vadd.f32 %v958, %v1190
        %v1192 = vpop.f32.mrb[0].mxu0
        %1193 = vdwg.mxu0
        %v1194 = vmax.f32 %v1068, 0.0
        %v1195 = vmax.f32 %v1071, 0.0
        %v1196 = vmax.f32 %v1076, 0.0
        %v1197 = vmax.f32 %v1079, 0.0
        %v1198 = vmax.f32 %v1084, 0.0
        %v1199 = vmax.f32 %v1087, 0.0
        %v1200 = vmax.f32 %v1092, 0.0
        %v1201 = vmax.f32 %v1095, 0.0
        %v1202 = vmax.f32 %v1100, 0.0
        %v1203 = vmax.f32 %v1103, 0.0
        %v1204 = vmax.f32 %v1108, 0.0
        %v1205 = vmax.f32 %v1111, 0.0
        %v1206 = vmax.f32 %v1116, 0.0
        %v1207 = vmax.f32 %v1119, 0.0
        %v1208 = vmax.f32 %v1124, 0.0
        %v1209 = vmax.f32 %v1127, 0.0
        %v1210 = vmax.f32 %v1132, 0.0
        %v1211 = vmax.f32 %v1135, 0.0
        %v1212 = vmax.f32 %v1140, 0.0
        %v1213 = vmax.f32 %v1143, 0.0
        %v1214 = vmax.f32 %v1148, 0.0
        %v1215 = vmax.f32 %v1151, 0.0
        %v1216 = vmax.f32 %v1156, 0.0
        %v1217 = vmax.f32 %v1159, 0.0
        %v1218 = vmax.f32 %v1164, 0.0
        %v1219 = vmax.f32 %v1167, 0.0
        %v1220 = vmax.f32 %v1172, 0.0
        %v1221 = vmax.f32 %v1175, 0.0
        %v1222 = vmax.f32 %v1180, 0.0
        %v1223 = vmax.f32 %v1183, 0.0
        %v1224 = vmax.f32 %v1188, 0.0
        %v1225 = vmax.f32 %v1191, 0.0
        %v1226 = vld [vmem:[%s7] sm:$0x1]
        %v1227 = vpack.c.bf16 %v1195, %v1194
        %v1228 = vpack.c.bf16 %v1197, %v1196
        %v1229 = vpack.c.bf16 %v1199, %v1198
        %v1230 = vpack.c.bf16 %v1201, %v1200
        %v1231 = vpack.c.bf16 %v1203, %v1202
        %v1232 = vpack.c.bf16 %v1205, %v1204
        %v1233 = vpack.c.bf16 %v1207, %v1206
        %v1234 = vpack.c.bf16 %v1209, %v1208
        %v1235 = vpack.c.bf16 %v1211, %v1210
        %v1236 = vpack.c.bf16 %v1213, %v1212
        %v1237 = vpack.c.bf16 %v1215, %v1214
        %v1238 = vpack.c.bf16 %v1217, %v1216
        %v1239 = vpack.c.bf16 %v1219, %v1218
        %v1240 = vpack.c.bf16 %v1221, %v1220
        %v1241 = vpack.c.bf16 %v1223, %v1222
        %v1242 = vpack.c.bf16 %v1225, %v1224
        %s1243 = sld [smem:[#allocation2]]
        %v1244 = vstv %s1243
        %v1246 = vsel %vm407, %v1226, 0
        %v1249 = vsel %vm407, %v1227, 0
        %v1252 = vsel %vm407, %v1228, 0
        %v1255 = vsel %vm407, %v1229, 0
        %v1258 = vsel %vm407, %v1230, 0
        %v1261 = vsel %vm407, %v1231, 0
        %v1264 = vsel %vm407, %v1232, 0
        %v1267 = vsel %vm407, %v1233, 0
        %v1270 = vsel %vm407, %v1234, 0
        %v1273 = vsel %vm407, %v1235, 0
        %v1276 = vsel %vm407, %v1236, 0
        %v1279 = vsel %vm407, %v1237, 0
        %v1282 = vsel %vm407, %v1238, 0
        %v1285 = vsel %vm407, %v1239, 0
        %v1288 = vsel %vm407, %v1240, 0
        %v1291 = vsel %vm407, %v1241, 0
        %v1294 = vsel %vm407, %v1242, 0
        %1296 = vmatprep.subr.bf16.mxu0 0
        %1297 = vmatpush1.bf16.xpose.msra.mxu0 %v1249
        %1298 = vmatprep.subr.bf16.mxu0 0
        %1299 = vmatpush1.bf16.xpose.msra.mxu0 %v1252
        %1300 = vmatprep.subr.bf16.mxu0 0
        %1301 = vmatpush1.bf16.xpose.msra.mxu0 %v1255
        %1302 = vmatprep.subr.bf16.mxu0 0
        %1303 = vmatpush1.bf16.xpose.msra.mxu0 %v1258
        %1304 = vmatprep.subr.bf16.mxu0 0
        %1305 = vmatpush1.bf16.xpose.msra.mxu0 %v1261
        %1306 = vmatprep.subr.bf16.mxu0 0
        %1307 = vmatpush1.bf16.xpose.msra.mxu0 %v1264
        %1308 = vmatprep.subr.bf16.mxu0 0
        %1309 = vmatpush1.bf16.xpose.msra.mxu0 %v1267
        %1310 = vmatprep.subr.bf16.mxu0 0
        %1311 = vmatpush1.bf16.xpose.msra.mxu0 %v1270
        %1312 = vmatprep.subr.bf16.mxu0 0
        %1313 = vmatpush1.bf16.xpose.msra.mxu0 %v1273
        %1314 = vmatprep.subr.bf16.mxu0 0
        %1315 = vmatpush1.bf16.xpose.msra.mxu0 %v1276
        %1316 = vmatprep.subr.bf16.mxu0 0
        %1317 = vmatpush1.bf16.xpose.msra.mxu0 %v1279
        %1318 = vmatprep.subr.bf16.mxu0 0
        %1319 = vmatpush1.bf16.xpose.msra.mxu0 %v1282
        %1320 = vmatprep.subr.bf16.mxu0 0
        %1321 = vmatpush1.bf16.xpose.msra.mxu0 %v1285
        %1322 = vmatprep.subr.bf16.mxu0 0
        %1323 = vmatpush1.bf16.xpose.msra.mxu0 %v1288
        %1324 = vmatprep.subr.bf16.mxu0 0
        %1325 = vmatpush1.bf16.xpose.msra.mxu0 %v1291
        %1326 = vmatprep.subr.bf16.mxu0 0
        %1327 = vmatpush1.bf16.xpose.msra.mxu0 %v1294
        %1328 = vmatprep.mubr.bf16.mxu0 0
        %1329 = vmatmul.mubr.bf16.gmra.mrb[0].mxu0 %v1246
        %v1330 = vpop.f32.mrb[0].mxu0
        %v1331 = vadd.f32 %v1244, %v1330
        %v1332 = vpop.f32.mrb[0].mxu0
        %v1333 = vadd.f32 %v1244, %v1332
        %v1334 = vpop.f32.mrb[0].mxu0
        %v1335 = vpop.f32.mrb[0].mxu0
        %1336 = vdwg.mxu0
        %v1339 = vcombine.low %v1331, %v1333
        %v1341 = vunpack.c.l.s4 1966171168
        %v1342 = vunpack.c.0.s8 %v1341
        %v1343 = vlaneseq
        %v1344 = vshrl.u32 %v1343, 7
        %v1345 = vsub.s32 %v1342, %v1344
        %v1346 = vrot.slane %v1339, %v1345
        %v1348 = vunpack.c.l.s4 1966171168
        %v1349 = vunpack.c.0.s8 %v1348
        %v1350 = vlaneseq
        %v1351 = vshrl.u32 %v1350, 7
        %v1352 = vsub.s32 %v1349, %v1351
        %v1353 = vrot.slane %v1346, %v1352
        %v1355 = vlaneseq
        %vm1356 = vcmp.ge.s32.totalorder %v1355, 0
        %vm1357 = vcmp.lt.s32.totalorder %v1355, 256
        %vm1358 = vmand %vm1356, %vm1357
        %1359 = vst.msk [vmem:[%s327] sm:$0x3] %vm1358, %v1353
        %s1360 = sand.u32 %s226, 1
        %s1361 = scalar_lea.sflag [#allocation4], %s1360
        %s1362 = sand.u32 %s226, 1
        %s1363 = smul.addr %s1362, 2
        %s1364 = scalar_lea.vmem [#allocation3], %s1363
        // Predicated region
        $region57: #{tpu_custom_call.1} parent=55 // pred_check
          %p1365 = pneg %p236
        $region58: #{tpu_custom_call.1} parent=55 // pred_check_branch
          %1367 = sbr.rel (%p1365) target = $region60
        $region59: #{tpu_custom_call.1} parent=55 // pred_region
          %s1368 = smul.u32 2, %s24
          %s1370 = ssub.s32 32, 32
          %1371 = vsyncadd %s1361, %s1370
          %s1372 = smul.addr %s1368, 16
          %s1373 = scalar_lea.hbm %s9, %s1372
          %s1375 = sshll.u32 %s1364, 4
          %s1376 = int_to_ptr.vmem [resolvable:$true] %s1375
          %1378 = dma.vmem_to_hbm [thread:$0]  %s1376, 32, %s1373, %s1361
        $region60: #{tpu_custom_call.1} parent=55 // pred_fallthru
          _
      $region56: #{tpu_custom_call.1} parent=5 // pred_fallthru
        _
      %p1379 = scmp.le.s32.totalorder 2, %s19
      // Predicated region
      $region61: #{tpu_custom_call.1} parent=5 // pred_check
        %p1380 = pneg %p1379
      $region62: #{tpu_custom_call.1} parent=5 // pred_check_branch
        %1382 = sbr.rel (%p1380) target = $region64
      $region63: #{tpu_custom_call.1} parent=5 // pred_region
        %s1383 = ssub.s32 %s19, 2
        // Predicated region
        $region65: #{tpu_custom_call.1} parent=63 // pred_check
          %p1384 = pneg %p242
        $region66: #{tpu_custom_call.1} parent=63 // pred_check_branch
          %1386 = sbr.rel (%p1384) target = $region68
        $region67: #{tpu_custom_call.1} parent=63 // pred_region
          %s1387 = sand.u32 %s227, 1
          %s1388 = scalar_lea.sflag [#allocation4], %s1387
          %s1389 = sand.u32 %s227, 1
          %s1390 = smul.addr %s1389, 2
          %s1391 = scalar_lea.vmem [#allocation3], %s1390
          %1392 = dma.done %s1388, 32
        $region68: #{tpu_custom_call.1} parent=63 // pred_fallthru
          _
      $region64: #{tpu_custom_call.1} parent=5 // pred_fallthru
        _
    $region6: #{tpu_custom_call.1} parent=1 // loop_footer
      %s23 = sadd.s32 1, %s19
    $region7: #{tpu_custom_call.1} parent=1 // loop_footer_branch
      %18 = sbr.rel target = $region3
    $region8: #{tpu_custom_call.1} parent=1 // loop_exit
      _
    %1393 = vsyncpa [#allocation4], 1
    %s1394 = scalar_lea.sflag [#allocation4], 1
    %1395 = vsyncpa %s1394, 1

</llo_original>
